<compile_context>
chip_gen: v5e
topology: v5e:2x2
jax: 0.10.0
libtpu: 0.0.40
codegen_flags: <defaults>
</compile_context>

<pallas_src>
import functools
import math

import jax
import jax.numpy as jnp
from jax.experimental import pallas as pl
from jax.experimental.pallas import tpu as pltpu


# ------------------------------ Pallas kernel ------------------------------- #

def layernorm_kernel(x_ref, g_ref, b_ref, o_ref, *, eps, feat_dim):
    # x_ref/o_ref: (TILE_R, D) in the input dtype; g_ref/b_ref: (1, D) f32.
    x = x_ref[...].astype(jnp.float32)                    # upcast on the VPU (cheap)
    mean = jnp.mean(x, axis=-1, keepdims=True)
    d = x - mean
    # torch.std default is unbiased (ddof = 1). Guard D == 1 against div-by-zero
    # (torch would return NaN there; LayerNorm over a single feature is nonsensical).
    denom = feat_dim - 1 if feat_dim > 1 else 1
    var = jnp.sum(d * d, axis=-1, keepdims=True) * (1.0 / denom)
    std = jnp.sqrt(var)
    # 1/(std + eps): approximate EUP reciprocal + one Newton step -> ~f32 accurate,
    # keeps the VALU free (this kernel is HBM-bound anyway).
    t = std + eps
    inv = pl.reciprocal(t, approx=True)
    inv = inv * (2.0 - t * inv)
    o_ref[...] = (g_ref[...] * (d * inv) + b_ref[...]).astype(o_ref.dtype)


# ------------------------------ host wrapper -------------------------------- #

def _choose_tile_rows(R, D):
    """~1 MiB (f32) of activations per block, rows a multiple of 16."""
    target_bytes = 1 << 20
    tile = target_bytes // max(D * 4, 1)
    tile = max(16, min(tile, 1024))
    tile -= tile % 16                       # bf16 sublane packing friendly
    # Don't allocate a block (much) larger than the whole problem.
    tile = min(tile, ((R + 15) // 16) * 16)
    return max(tile, 16)


def layernorm(x, gamma, beta, eps=1e-6):
    """LayerNorm over the last dim of x (any leading shape), custom-DeiT semantics."""
    orig_shape = x.shape
    D = orig_shape[-1]
    R = int(math.prod(orig_shape[:-1])) if len(orig_shape) > 1 else 1
    x2 = x.reshape(R, D)                    # free reshape; keep native dtype

    g = gamma.reshape(1, D).astype(jnp.float32)   # tiny params; f32 for the math
    b = beta.reshape(1, D).astype(jnp.float32)

    tile_r = _choose_tile_rows(R, D)
    grid = (pl.cdiv(R, tile_r),)

    out = pl.pallas_call(
        functools.partial(layernorm_kernel, eps=eps, feat_dim=D),
        out_shape=jax.ShapeDtypeStruct((R, D), x.dtype),
        grid=grid,
        in_specs=[
            pl.BlockSpec((tile_r, D), lambda i: (i, 0)),   # activation row tiles
            pl.BlockSpec((1, D), lambda i: (0, 0)),        # gamma (grid-invariant)
            pl.BlockSpec((1, D), lambda i: (0, 0)),        # beta  (grid-invariant)
        ],
        out_specs=pl.BlockSpec((tile_r, D), lambda i: (i, 0)),
        compiler_params=pltpu.CompilerParams(
            dimension_semantics=("parallel",)),            # rows are independent
    )(x2, g, b)

    return out.reshape(orig_shape)


# --------------------------------- driver ------------------------------------ #

def layernorm_ref(x, gamma, beta, eps=1e-6):
    # Pure-JAX reference matching the PyTorch module (unbiased std, /(std+eps)).
    mean = jnp.mean(x, axis=-1, keepdims=True)
    std = jnp.std(x, axis=-1, keepdims=True, ddof=1)
    return gamma * (x - mean) / (std + eps) + beta


if __name__ == "__main__":
    # Small shapes consistent with DeiT usage: (batch=2, tokens=18, embed_dim=32).
    B, N, D = 2, 18, 32
    key = jax.random.PRNGKey(0)
    kx, kg, kb = jax.random.split(key, 3)

    x = jax.random.normal(kx, (B, N, D), jnp.float32)
    # Module initializes gamma=1, beta=0; perturb them so they are exercised.
    gamma = 1.0 + 0.1 * jax.random.normal(kg, (D,), jnp.float32)
    beta = 0.1 * jax.random.normal(kb, (D,), jnp.float32)

    out = layernorm(x, gamma, beta)
    out = jax.block_until_ready(out)

    ref = layernorm_ref(x, gamma, beta)
    assert out.shape == (B, N, D)
    err = float(jnp.max(jnp.abs(out - ref)))
    assert jnp.allclose(out, ref, rtol=2e-5, atol=2e-5), err

    print("KERNEL_OK")
</pallas_src>

<mosaic_0001>
module attributes {stable_mosaic.version = 11 : i64} {
  func.func @layernorm_kernel(%arg0: i32, %arg1: memref<48x32xf32, #tpu.memory_space<vmem>>, %arg2: memref<1x32xf32, #tpu.memory_space<vmem>>, %arg3: memref<1x32xf32, #tpu.memory_space<vmem>>, %arg4: memref<48x32xf32, #tpu.memory_space<vmem>>) attributes {dimension_semantics = [#tpu.dimension_semantics<parallel>], iteration_bounds = array<i64: 1>, scalar_prefetch = 0 : i64, scratch_operands = 0 : i64, tpu.core_type = #tpu.core_type<tc>, window_params = [{transform_indices = @transform_0, window_bounds = array<i64: 48, 32>}, {pipeline_mode = #tpu.pipeline_mode<synchronous>, transform_indices = @transform_1, window_bounds = array<i64: 1, 32>}, {pipeline_mode = #tpu.pipeline_mode<synchronous>, transform_indices = @transform_2, window_bounds = array<i64: 1, 32>}, {transform_indices = @transform_3, window_bounds = array<i64: 48, 32>}]} {
    %c0 = arith.constant 0 : index
    %c0_0 = arith.constant 0 : index
    %0 = vector.load %arg1[%c0, %c0_0] : memref<48x32xf32, #tpu.memory_space<vmem>>, vector<48x32xf32>
    %cst = arith.constant dense<0.000000e+00> : vector<48xf32>
    %1 = vector.multi_reduction <add>, %0, %cst [1] : vector<48x32xf32> to vector<48xf32>
    %2 = vector.shape_cast %1 : vector<48xf32> to vector<48x1xf32>
    %cst_1 = arith.constant 3.200000e+01 : f32
    %3 = vector.broadcast %cst_1 : f32 to vector<48x1xf32>
    %4 = arith.divf %2, %3 : vector<48x1xf32>
    %5 = vector.broadcast %4 : vector<48x1xf32> to vector<48x32xf32>
    %6 = arith.subf %0, %5 : vector<48x32xf32>
    %7 = arith.mulf %6, %6 : vector<48x32xf32>
    %cst_2 = arith.constant dense<0.000000e+00> : vector<48xf32>
    %8 = vector.multi_reduction <add>, %7, %cst_2 [1] : vector<48x32xf32> to vector<48xf32>
    %9 = vector.shape_cast %8 : vector<48xf32> to vector<48x1xf32>
    %cst_3 = arith.constant 0.0322580636 : f32
    %10 = vector.broadcast %cst_3 : f32 to vector<48x1xf32>
    %11 = arith.mulf %9, %10 : vector<48x1xf32>
    %12 = math.sqrt %11 : vector<48x1xf32>
    %cst_4 = arith.constant 9.99999997E-7 : f32
    %13 = vector.broadcast %cst_4 : f32 to vector<48x1xf32>
    %14 = arith.addf %12, %13 : vector<48x1xf32>
    %15 = tpu.reciprocal %14 {approx = true} : vector<48x1xf32> -> vector<48x1xf32>
    %16 = arith.mulf %14, %15 : vector<48x1xf32>
    %cst_5 = arith.constant 2.000000e+00 : f32
    %17 = vector.broadcast %cst_5 : f32 to vector<48x1xf32>
    %18 = arith.subf %17, %16 : vector<48x1xf32>
    %19 = arith.mulf %15, %18 : vector<48x1xf32>
    %c0_6 = arith.constant 0 : index
    %c0_7 = arith.constant 0 : index
    %20 = vector.load %arg2[%c0_6, %c0_7] : memref<1x32xf32, #tpu.memory_space<vmem>>, vector<1x32xf32>
    %21 = vector.broadcast %19 : vector<48x1xf32> to vector<48x32xf32>
    %22 = arith.mulf %6, %21 : vector<48x32xf32>
    %23 = vector.broadcast %20 : vector<1x32xf32> to vector<48x32xf32>
    %24 = arith.mulf %23, %22 : vector<48x32xf32>
    %c0_8 = arith.constant 0 : index
    %c0_9 = arith.constant 0 : index
    %25 = vector.load %arg3[%c0_8, %c0_9] : memref<1x32xf32, #tpu.memory_space<vmem>>, vector<1x32xf32>
    %26 = vector.broadcast %25 : vector<1x32xf32> to vector<48x32xf32>
    %27 = arith.addf %24, %26 : vector<48x32xf32>
    %c0_10 = arith.constant 0 : index
    %c0_11 = arith.constant 0 : index
    %28 = vector.load %arg4[%c0_10, %c0_11] : memref<48x32xf32, #tpu.memory_space<vmem>>, vector<48x32xf32>
    tpu.vector_store %arg4[%c0_10, %c0_11], %27 {strides = array<i32>} : memref<48x32xf32, #tpu.memory_space<vmem>>, vector<48x32xf32>,
    return
  }
  func.func @transform_0(%arg0: i32) -> (i32, i32) {
    %c0_i32 = arith.constant 0 : i32
    %c0_i32_0 = arith.constant 0 : i32
    return %arg0, %c0_i32 : i32, i32
  }
  func.func @transform_1(%arg0: i32) -> (i32, i32) {
    %c0_i32 = arith.constant 0 : i32
    %c0_i32_0 = arith.constant 0 : i32
    %c0_i32_1 = arith.constant 0 : i32
    return %c0_i32, %c0_i32_0 : i32, i32
  }
  func.func @transform_2(%arg0: i32) -> (i32, i32) {
    %c0_i32 = arith.constant 0 : i32
    %c0_i32_0 = arith.constant 0 : i32
    %c0_i32_1 = arith.constant 0 : i32
    return %c0_i32, %c0_i32_0 : i32, i32
  }
  func.func @transform_3(%arg0: i32) -> (i32, i32) {
    %c0_i32 = arith.constant 0 : i32
    %c0_i32_0 = arith.constant 0 : i32
    return %arg0, %c0_i32 : i32, i32
  }
}

</mosaic_0001>

<llo_original>
// kernel: tpu_custom_call.1
$region0: #{tpu_custom_call.1}
  #allocation0 [shape = 'u32[]', space=smem, size = 0x4, offset = 0x4, fixed_abs, tag = 'smem constant byte address 0x4 - core index']
  #allocation1 [shape = 'u32[72,128]{1,0:T(1,128)}', space=vmem, size = 0x9000, scoped, tag = 'internal scratch']
  %s0 = inlined_call_operand.vmem [shape: f32[36,32], index: 0, kind: input, shape index: {}]
  %s1 = inlined_call_operand.vmem [shape: f32[1,32], index: 1, kind: input, shape index: {}]
  %s2 = inlined_call_operand.vmem [shape: f32[1,32], index: 2, kind: input, shape index: {}]
  %s3 = inlined_call_operand.vmem [shape: f32[36,32], index: 3, kind: output, shape index: {}]
  %s4 = sld [smem:[#allocation0]]
  $region56: #{tpu_custom_call.1} parent=0
    _
  %s6 = ssub.s32 1, %s4
  %s7 = scalar_select 0, %s6, %s4
  $region1: #{tpu_custom_call.1} parent=0
    #allocation2 [shape = 'u8[24576]{0}', space=vmem, size = 0x6000, scoped, tag = 'output window, operand 0, single buffered']
    // Predicated region
    $region2: #{tpu_custom_call.1} parent=1 // pred_check
      _
    $region3: #{tpu_custom_call.1} parent=1 // pred_check_branch
      %9 = sbr.rel (0) target = $region5
    $region4: #{tpu_custom_call.1} parent=1 // pred_region
      _
    $region5: #{tpu_custom_call.1} parent=1 // pred_fallthru
      _
    // Predicated region
    $region6: #{tpu_custom_call.1} parent=1 // pred_check
      _
    $region7: #{tpu_custom_call.1} parent=1 // pred_check_branch
      %11 = sbr.rel (0) target = $region9
    $region8: #{tpu_custom_call.1} parent=1 // pred_region
      _
    $region9: #{tpu_custom_call.1} parent=1 // pred_fallthru
      _
    // Predicated region
    $region10: #{tpu_custom_call.1} parent=1 // pred_check
      _
    $region11: #{tpu_custom_call.1} parent=1 // pred_check_branch
      %13 = sbr.rel (0) target = $region13
    $region12: #{tpu_custom_call.1} parent=1 // pred_region
      _
    $region13: #{tpu_custom_call.1} parent=1 // pred_fallthru
      _
    %v14 = vld [vmem:[%s0] sm:$0xff]
    %v15 = vld [vmem:[%s0 + $0x8] sm:$0xff]
    %v16 = vld [vmem:[%s0 + $0x10] sm:$0xff]
    %v17 = vld [vmem:[%s0 + $0x18] sm:$0xff]
    %v18 = vld [vmem:[%s0 + $0x20] sm:$0xff]
    %v19 = vld [vmem:[%s0 + $0x28] sm:$0xff]
    %vm20 = vcmask 261120
    %v21 = vsel %vm20, %v14, 0.0
    %22 = vadd.xlane.f32.xlu0 %v21
    %v23 = vpop.xlane.xlu0 %22
    %v24 = vsel %vm20, %v15, 0.0
    %25 = vadd.xlane.f32.xlu0 %v24
    %v26 = vpop.xlane.xlu0 %25
    %v27 = vsel %vm20, %v16, 0.0
    %28 = vadd.xlane.f32.xlu0 %v27
    %v29 = vpop.xlane.xlu0 %28
    %v30 = vsel %vm20, %v17, 0.0
    %31 = vadd.xlane.f32.xlu0 %v30
    %v32 = vpop.xlane.xlu0 %31
    %v33 = vsel %vm20, %v18, 0.0
    %34 = vadd.xlane.f32.xlu0 %v33
    %v35 = vpop.xlane.xlu0 %34
    %v36 = vsel %vm20, %v19, 0.0
    %37 = vadd.xlane.f32.xlu0 %v36
    %v38 = vpop.xlane.xlu0 %37
    %v39 = vrcp.pop 32.0
    %v40 = vmul.f32 32.0, %v39
    %v41 = vsub.f32 1.0, %v40
    %v42 = vmul.f32 %v39, %v41
    %v43 = vadd.f32 %v39, %v42
    %vm44 = vweird.f32 %v39
    %v45 = vsel %vm44, %v39, %v43
    %v46 = vmul.f32 %v23, %v45
    %v47 = vmul.f32 %v26, %v45
    %v48 = vmul.f32 %v29, %v45
    %v49 = vmul.f32 %v32, %v45
    %v50 = vmul.f32 %v35, %v45
    %v51 = vmul.f32 %v38, %v45
    %v52 = vsub.f32 %v14, %v46
    %v53 = vsub.f32 %v15, %v47
    %v54 = vsub.f32 %v16, %v48
    %v55 = vsub.f32 %v17, %v49
    %v56 = vsub.f32 %v18, %v50
    %v57 = vsub.f32 %v19, %v51
    %v58 = vmul.f32 %v52, %v52
    %v59 = vmul.f32 %v53, %v53
    %v60 = vmul.f32 %v54, %v54
    %v61 = vmul.f32 %v55, %v55
    %v62 = vmul.f32 %v56, %v56
    %v63 = vmul.f32 %v57, %v57
    %v64 = vsel %vm20, %v58, 0.0
    %65 = vadd.xlane.f32.xlu0 %v64
    %v66 = vpop.xlane.xlu0 %65
    %v67 = vsel %vm20, %v59, 0.0
    %68 = vadd.xlane.f32.xlu0 %v67
    %v69 = vpop.xlane.xlu0 %68
    %v70 = vsel %vm20, %v60, 0.0
    %71 = vadd.xlane.f32.xlu0 %v70
    %v72 = vpop.xlane.xlu0 %71
    %v73 = vsel %vm20, %v61, 0.0
    %74 = vadd.xlane.f32.xlu0 %v73
    %v75 = vpop.xlane.xlu0 %74
    %v76 = vsel %vm20, %v62, 0.0
    %77 = vadd.xlane.f32.xlu0 %v76
    %v78 = vpop.xlane.xlu0 %77
    %v79 = vsel %vm20, %v63, 0.0
    %80 = vadd.xlane.f32.xlu0 %v79
    %v81 = vpop.xlane.xlu0 %80
    %v82 = vmul.f32 %v66, 0.032258064
    %v83 = vmul.f32 %v69, 0.032258064
    %v84 = vmul.f32 %v72, 0.032258064
    %v85 = vmul.f32 %v75, 0.032258064
    %v86 = vmul.f32 %v78, 0.032258064
    %v87 = vmul.f32 %v81, 0.032258064
    %v88 = vrsqrt.pop %v82
    %v89 = vmul.f32 %v88, %v82
    %v90 = vmul.f32 %v89, %v88
    %v91 = vmul.f32 0.5, %v90
    %v92 = vsub.f32 1.5, %v91
    %v93 = vmul.f32 %v88, %v92
    %v94 = vmul.f32 %v82, %v93
    %vm95 = vcmp.eq.f32.partialorder %v82, inf
    %v96 = vsel %vm95, %v82, %v94
    %vm97 = vcmp.eq.f32.partialorder %v82, 0.0
    %v98 = vand.u32 %v82, 2147483648
    %v99 = vsel %vm97, %v98, %v96
    %v100 = vrsqrt.pop %v83
    %v101 = vmul.f32 %v100, %v83
    %v102 = vmul.f32 %v101, %v100
    %v103 = vmul.f32 0.5, %v102
    %v104 = vsub.f32 1.5, %v103
    %v105 = vmul.f32 %v100, %v104
    %v106 = vmul.f32 %v83, %v105
    %vm107 = vcmp.eq.f32.partialorder %v83, inf
    %v108 = vsel %vm107, %v83, %v106
    %vm109 = vcmp.eq.f32.partialorder %v83, 0.0
    %v110 = vand.u32 %v83, 2147483648
    %v111 = vsel %vm109, %v110, %v108
    %v112 = vrsqrt.pop %v84
    %v113 = vmul.f32 %v112, %v84
    %v114 = vmul.f32 %v113, %v112
    %v115 = vmul.f32 0.5, %v114
    %v116 = vsub.f32 1.5, %v115
    %v117 = vmul.f32 %v112, %v116
    %v118 = vmul.f32 %v84, %v117
    %vm119 = vcmp.eq.f32.partialorder %v84, inf
    %v120 = vsel %vm119, %v84, %v118
    %vm121 = vcmp.eq.f32.partialorder %v84, 0.0
    %v122 = vand.u32 %v84, 2147483648
    %v123 = vsel %vm121, %v122, %v120
    %v124 = vrsqrt.pop %v85
    %v125 = vmul.f32 %v124, %v85
    %v126 = vmul.f32 %v125, %v124
    %v127 = vmul.f32 0.5, %v126
    %v128 = vsub.f32 1.5, %v127
    %v129 = vmul.f32 %v124, %v128
    %v130 = vmul.f32 %v85, %v129
    %vm131 = vcmp.eq.f32.partialorder %v85, inf
    %v132 = vsel %vm131, %v85, %v130
    %vm133 = vcmp.eq.f32.partialorder %v85, 0.0
    %v134 = vand.u32 %v85, 2147483648
    %v135 = vsel %vm133, %v134, %v132
    %v136 = vrsqrt.pop %v86
    %v137 = vmul.f32 %v136, %v86
    %v138 = vmul.f32 %v137, %v136
    %v139 = vmul.f32 0.5, %v138
    %v140 = vsub.f32 1.5, %v139
    %v141 = vmul.f32 %v136, %v140
    %v142 = vmul.f32 %v86, %v141
    %vm143 = vcmp.eq.f32.partialorder %v86, inf
    %v144 = vsel %vm143, %v86, %v142
    %vm145 = vcmp.eq.f32.partialorder %v86, 0.0
    %v146 = vand.u32 %v86, 2147483648
    %v147 = vsel %vm145, %v146, %v144
    %v148 = vrsqrt.pop %v87
    %v149 = vmul.f32 %v148, %v87
    %v150 = vmul.f32 %v149, %v148
    %v151 = vmul.f32 0.5, %v150
    %v152 = vsub.f32 1.5, %v151
    %v153 = vmul.f32 %v148, %v152
    %v154 = vmul.f32 %v87, %v153
    %vm155 = vcmp.eq.f32.partialorder %v87, inf
    %v156 = vsel %vm155, %v87, %v154
    %vm157 = vcmp.eq.f32.partialorder %v87, 0.0
    %v158 = vand.u32 %v87, 2147483648
    %v159 = vsel %vm157, %v158, %v156
    %v160 = vadd.f32 %v99, 1e-06
    %v161 = vadd.f32 %v111, 1e-06
    %v162 = vadd.f32 %v123, 1e-06
    %v163 = vadd.f32 %v135, 1e-06
    %v164 = vadd.f32 %v147, 1e-06
    %v165 = vadd.f32 %v159, 1e-06
    %v166 = vrcp.pop %v160
    %v167 = vrcp.pop %v161
    %v168 = vrcp.pop %v162
    %v169 = vrcp.pop %v163
    %v170 = vrcp.pop %v164
    %v171 = vrcp.pop %v165
    %v172 = vmul.f32 %v160, %v166
    %v173 = vmul.f32 %v161, %v167
    %v174 = vmul.f32 %v162, %v168
    %v175 = vmul.f32 %v163, %v169
    %v176 = vmul.f32 %v164, %v170
    %v177 = vmul.f32 %v165, %v171
    %v178 = vsub.f32 2.0, %v172
    %v179 = vsub.f32 2.0, %v173
    %v180 = vsub.f32 2.0, %v174
    %v181 = vsub.f32 2.0, %v175
    %v182 = vsub.f32 2.0, %v176
    %v183 = vsub.f32 2.0, %v177
    %v184 = vmul.f32 %v166, %v178
    %v185 = vmul.f32 %v167, %v179
    %v186 = vmul.f32 %v168, %v180
    %v187 = vmul.f32 %v169, %v181
    %v188 = vmul.f32 %v170, %v182
    %v189 = vmul.f32 %v171, %v183
    %v190 = vld [vmem:[%s1] sm:$0x1]
    %v191 = vmul.f32 %v52, %v184
    %v192 = vmul.f32 %v53, %v185
    %v193 = vmul.f32 %v54, %v186
    %v194 = vmul.f32 %v55, %v187
    %v195 = vmul.f32 %v56, %v188
    %v196 = vmul.f32 %v57, %v189
    %v198 = vperm.slane %v190, 0
    %v200 = vmul.f32 %v198, %v191
    %v201 = vmul.f32 %v198, %v192
    %v202 = vmul.f32 %v198, %v193
    %v203 = vmul.f32 %v198, %v194
    %v204 = vmul.f32 %v198, %v195
    %v205 = vmul.f32 %v198, %v196
    %v206 = vld [vmem:[%s2] sm:$0x1]
    %v208 = vperm.slane %v206, 0
    %v210 = vadd.f32 %v200, %v208
    %v211 = vadd.f32 %v201, %v208
    %v212 = vadd.f32 %v202, %v208
    %v213 = vadd.f32 %v203, %v208
    %v214 = vadd.f32 %v204, %v208
    %v215 = vadd.f32 %v205, %v208
    %216 = vst.msk [vmem:[#allocation2] sm:$0xff] %vm20, %v210
    %217 = vst.msk [vmem:[#allocation2 + $0x8] sm:$0xff] %vm20, %v211
    %218 = vst.msk [vmem:[#allocation2 + $0x10] sm:$0xff] %vm20, %v212
    %219 = vst.msk [vmem:[#allocation2 + $0x18] sm:$0xff] %vm20, %v213
    %220 = vst.msk [vmem:[#allocation2 + $0x20] sm:$0xff] %vm20, %v214
    %221 = vst.msk [vmem:[#allocation2 + $0x28] sm:$0xff] %vm20, %v215
    // Predicated region
    $region14: #{tpu_custom_call.1} parent=1 // pred_check
      _
    $region15: #{tpu_custom_call.1} parent=1 // pred_check_branch
      %223 = sbr.rel (0) target = $region17
    $region16: #{tpu_custom_call.1} parent=1 // pred_region
      // Predicated region
      $region18: #{tpu_custom_call.1} parent=16 // pred_check
        _
      $region19: #{tpu_custom_call.1} parent=16 // pred_check_branch
        %225 = sbr.rel (0) target = $region21
      $region20: #{tpu_custom_call.1} parent=16 // pred_region
        // Predicated region
        $region22: #{tpu_custom_call.1} parent=20 // pred_check
          _
        $region23: #{tpu_custom_call.1} parent=20 // pred_check_branch
          %227 = sbr.rel (0) target = $region25
        $region24: #{tpu_custom_call.1} parent=20 // pred_region
          // Predicated region
          $region37: #{tpu_custom_call.1} parent=24 // pred_check
            _
          $region38: #{tpu_custom_call.1} parent=24 // pred_check_branch
            %251 = sbr.rel (0) target = $region40
          $region39: #{tpu_custom_call.1} parent=24 // pred_region
            loop: start=0, step=1, limit=1
            $region41: #{tpu_custom_call.1} parent=39 // loop_pre_header
              _
            $region42: #{tpu_custom_call.1} parent=39 // loop_header
              %s253 = sphi 0, %s257
              %p254 = scmp.ge.s32.totalorder %s253, 1
              %s258 = sphi [#allocation2], [#allocation2]
              %s259 = sphi %s3, %s3
            $region43: #{tpu_custom_call.1} parent=39 // loop_header_branch
              %256 = sbr.rel (%p254) target = $region47
            $region44: #{tpu_custom_call.1} parent=39 // loop_body
              %v260 = vld [vmem:[%s258] sm:$0xff]
              %261 = vst [vmem:[%s259] sm:$0xff] %v260
              %v262 = vld [vmem:[%s258 + $0x8] sm:$0xff]
              %263 = vst [vmem:[%s259 + $0x8] sm:$0xff] %v262
              %v264 = vld [vmem:[%s258 + $0x10] sm:$0xff]
              %265 = vst [vmem:[%s259 + $0x10] sm:$0xff] %v264
              %v266 = vld [vmem:[%s258 + $0x18] sm:$0xff]
              %267 = vst [vmem:[%s259 + $0x18] sm:$0xff] %v266
              %v268 = vld [vmem:[%s258 + $0x20] sm:$0xff]
              %269 = vst [vmem:[%s259 + $0x20] sm:$0xff] %v268
            $region45: #{tpu_custom_call.1} parent=39 // loop_footer
              %s257 = sadd.s32 1, %s253
            $region46: #{tpu_custom_call.1} parent=39 // loop_footer_branch
              %252 = sbr.rel target = $region42
            $region47: #{tpu_custom_call.1} parent=39 // loop_exit
              _
          $region40: #{tpu_custom_call.1} parent=24 // pred_fallthru
            _
          // Predicated region
          $region48: #{tpu_custom_call.1} parent=24 // pred_check
            _
          $region49: #{tpu_custom_call.1} parent=24 // pred_check_branch
            %271 = sbr.rel target = $region51
          $region50: #{tpu_custom_call.1} parent=24 // pred_region
            _
          $region51: #{tpu_custom_call.1} parent=24 // pred_fallthru
            _
        $region25: #{tpu_custom_call.1} parent=20 // pred_fallthru
          _
        // Predicated region
        $region26: #{tpu_custom_call.1} parent=20 // pred_check
          _
        $region27: #{tpu_custom_call.1} parent=20 // pred_check_branch
          %229 = sbr.rel target = $region29
        $region28: #{tpu_custom_call.1} parent=20 // pred_region
          %s231 = ssub.s32 256, 1
          loop: start=0, step=1, limit=1
          $region30: #{tpu_custom_call.1} parent=28 // loop_pre_header
            _
          $region31: #{tpu_custom_call.1} parent=28 // loop_header
            %s233 = sphi 0, %s237
            %p234 = scmp.ge.s32.totalorder %s233, 1
            %s238 = sphi [#allocation2], [#allocation2]
            %s239 = sphi %s3, %s3
          $region32: #{tpu_custom_call.1} parent=28 // loop_header_branch
            %236 = sbr.rel (%p234) target = $region36
          $region33: #{tpu_custom_call.1} parent=28 // loop_body
            %v240 = vld [vmem:[%s238] sm:%s231]
            %241 = vst [vmem:[%s239] sm:%s231] %v240
            %v242 = vld [vmem:[%s238 + $0x8] sm:%s231]
            %243 = vst [vmem:[%s239 + $0x8] sm:%s231] %v242
            %v244 = vld [vmem:[%s238 + $0x10] sm:%s231]
            %245 = vst [vmem:[%s239 + $0x10] sm:%s231] %v244
            %v246 = vld [vmem:[%s238 + $0x18] sm:%s231]
            %247 = vst [vmem:[%s239 + $0x18] sm:%s231] %v246
            %v248 = vld [vmem:[%s238 + $0x20] sm:%s231]
            %249 = vst [vmem:[%s239 + $0x20] sm:%s231] %v248
          $region34: #{tpu_custom_call.1} parent=28 // loop_footer
            %s237 = sadd.s32 1, %s233
          $region35: #{tpu_custom_call.1} parent=28 // loop_footer_branch
            %232 = sbr.rel target = $region31
          $region36: #{tpu_custom_call.1} parent=28 // loop_exit
            _
        $region29: #{tpu_custom_call.1} parent=20 // pred_fallthru
          _
      $region21: #{tpu_custom_call.1} parent=16 // pred_fallthru
        _
      %272 = vnop
    $region17: #{tpu_custom_call.1} parent=1 // pred_fallthru
      _
    // Predicated region
    $region52: #{tpu_custom_call.1} parent=1 // pred_check
      _
    $region53: #{tpu_custom_call.1} parent=1 // pred_check_branch
      %274 = sbr.rel (0) target = $region55
    $region54: #{tpu_custom_call.1} parent=1 // pred_region
      _
    $region55: #{tpu_custom_call.1} parent=1 // pred_fallthru
      _

</llo_original>
